<compile_context>
chip_gen: v5e
topology: v5e:2x2
jax: 0.10.0
libtpu: 0.0.40
codegen_flags: <defaults>
</compile_context>

<pallas_src>
import functools

import jax
import jax.numpy as jnp
from jax.experimental import pallas as pl
from jax.experimental.pallas import tpu as pltpu

_LANES = 128
_SUBLANES = 8
_GRAIN = _SUBLANES * _LANES          # 1024 elements = one (8,128) vreg group
_MAX_TILE_ROWS = 8192                # (8192,128) f32 = 4 MiB per pipeline buffer
_MIN_PALLAS_ELEMS = 1 << 20          # below this, plain JAX is faster (dispatch/step overhead)
_VMEM_LIMIT_BYTES = 32 * 1024 * 1024 # safe scoped-VMEM limit on v5e/v6e/v7x


def _num_tensorcores_per_chip() -> int:
    """Best-effort detection of multi-TensorCore chips (v7x). Defaults to 1."""
    try:
        kind = jax.devices()[0].device_kind.lower()
    except Exception:  # pragma: no cover - defensive
        return 1
    return 2 if ("v7" in kind or "7x" in kind) else 1


def _loss_terms_sum(x, label_val: float, ls: bool):
    """Plain-JAX sum of per-element loss terms (used for tails / tiny inputs)."""
    x = x.astype(jnp.float32)
    if ls:
        d = x - jnp.float32(label_val)
        return jnp.sum(d * d)
    # BCE with a static 0/1 label -> only one log term survives; PyTorch clamps
    # each log term at -100, i.e. each contribution at 100.
    if label_val >= 0.5:
        return jnp.sum(jnp.minimum(-jnp.log(x), jnp.float32(100.0)))
    return jnp.sum(jnp.minimum(-jnp.log(1.0 - x), jnp.float32(100.0)))


def _make_loss_kernel(ls: bool, label_val: float, tile_rows: int,
                      tiles_per_split: int, n_tiles: int, valid_rows_last: int):
    """Kernel body. `ls`=True -> MSE, False -> BCE. All sizes/labels static."""

    def contrib_of(x):
        x = x.astype(jnp.float32)
        if ls:
            d = x - jnp.float32(label_val)
            return d * d
        if label_val >= 0.5:
            return jnp.minimum(-jnp.log(x), jnp.float32(100.0))
        return jnp.minimum(-jnp.log(1.0 - x), jnp.float32(100.0))

    def fold8(x):
        # (r,128) with r % 8 == 0  ->  (8,128) via pure VPU vreg-to-vreg adds.
        return jnp.sum(x.reshape(-1, _SUBLANES, _LANES), axis=0)

    def kernel(y_ref, out_ref, acc_ref):
        c = pl.program_id(0)  # split (TensorCore) index   -- "parallel"
        t = pl.program_id(1)  # tile index within split    -- "arbitrary" (reduction)

        @pl.when(t == 0)
        def _init():
            # Zero-filling a single (8,128) vreg group is negligible.
            acc_ref[...] = jnp.zeros_like(acc_ref)

        if valid_rows_last == tile_rows:
            # No row-partial last tile: fully mask-free, branch-free path.
            acc_ref[...] += fold8(contrib_of(y_ref[...]))
        else:
            is_last = (c * tiles_per_split + t) == (n_tiles - 1)

            @pl.when(jnp.logical_not(is_last))
            def _full_tile():
                acc_ref[...] += fold8(contrib_of(y_ref[...]))

            @pl.when(is_last)
            def _ragged_tile():
                # Static, sublane-aligned slice: garbage rows of the
                # overhanging block are never read into the contribution.
                acc_ref[...] += fold8(contrib_of(y_ref[:valid_rows_last, :]))

        @pl.when(t == pl.num_programs(1) - 1)
        def _finalize():
            # Single cross-lane/sublane reduce per split; mean taken in wrapper.
            out_ref[0, 0] = jnp.sum(acc_ref[...])

    return kernel


@functools.partial(jax.jit, static_argnames=("real_label", "ls", "force_pallas"))
def loss_gan(y, real_label: bool = False, ls: bool = True, force_pallas: bool = False):
    """Pallas implementation of LossGAN.forward(y, real_label)."""
    label_val = 1.0 if real_label else 0.0
    numel = int(y.size)
    flat = y.reshape(-1)

    # Main body aligned to 1024-element (8x128) granularity; the <1024-element
    # tail (if any) is handled in plain JAX — no full-array pad copy.
    main = (numel // _GRAIN) * _GRAIN

    # Small-input fast path: XLA fuses elementwise+mean fine; kernel dispatch
    # and per-step overhead would dominate.
    if main == 0 or (numel < _MIN_PALLAS_ELEMS and not force_pallas):
        return _loss_terms_sum(flat, label_val, ls) / jnp.float32(numel)

    rows_main = main // _LANES                       # multiple of 8
    tile_rows = min(_MAX_TILE_ROWS, rows_main)       # multiple of 8
    n_tiles = pl.cdiv(rows_main, tile_rows)
    valid_rows_last = rows_main - (n_tiles - 1) * tile_rows  # multiple of 8, >= 8

    # Lane-dense 2-D view. When numel is 1024-aligned this reshape is free;
    # otherwise only the aligned prefix is passed to the kernel.
    y2d = (flat if main == numel else flat[:main]).reshape(rows_main, _LANES)

    # 2-way split only on multi-TC chips (v7x) and only when it divides the
    # tile count evenly, so there is never a clamped duplicate tile.
    num_splits = 2 if (_num_tensorcores_per_chip() >= 2
                       and n_tiles >= 4 and n_tiles % 2 == 0) else 1
    tiles_per_split = n_tiles // num_splits

    kernel = _make_loss_kernel(ls, label_val, tile_rows,
                               tiles_per_split, n_tiles, valid_rows_last)

    partials = pl.pallas_call(
        kernel,
        out_shape=jax.ShapeDtypeStruct((num_splits, 1), jnp.float32),
        grid_spec=pltpu.PrefetchScalarGridSpec(
            num_scalar_prefetch=0,
            grid=(num_splits, tiles_per_split),
            in_specs=[pl.BlockSpec((tile_rows, _LANES),
                                   lambda c, t: (c * tiles_per_split + t, 0))],
            out_specs=pl.BlockSpec((1, 1), lambda c, t: (c, 0),
                                   memory_space=pltpu.SMEM),
            scratch_shapes=[pltpu.VMEM((_SUBLANES, _LANES), jnp.float32)],
        ),
        compiler_params=pltpu.CompilerParams(
            dimension_semantics=("parallel", "arbitrary"),
            vmem_limit_bytes=_VMEM_LIMIT_BYTES,
        ),
    )(y2d)

    total = jnp.sum(partials)
    if main != numel:
        total = total + _loss_terms_sum(flat[main:], label_val, ls)
    return total / jnp.float32(numel)


if __name__ == "__main__":
    k0, k1, k2 = jax.random.split(jax.random.PRNGKey(0), 3)

    # Small discriminator-output-like tensor (NCHW), values in (0,1) so the
    # BCE branch is also well-defined. force_pallas=True exercises the kernel.
    y = jax.random.uniform(k0, (2, 4, 16, 16), dtype=jnp.float32,
                           minval=0.01, maxval=0.99)

    mse_fake = jax.block_until_ready(loss_gan(y, real_label=False, ls=True, force_pallas=True))
    mse_real = jax.block_until_ready(loss_gan(y, real_label=True, ls=True, force_pallas=True))
    bce_fake = jax.block_until_ready(loss_gan(y, real_label=False, ls=False, force_pallas=True))
    bce_real = jax.block_until_ready(loss_gan(y, real_label=True, ls=False, force_pallas=True))

    assert jnp.allclose(mse_fake, jnp.mean(y ** 2), rtol=1e-5, atol=1e-6), mse_fake
    assert jnp.allclose(mse_real, jnp.mean((y - 1.0) ** 2), rtol=1e-5, atol=1e-6), mse_real
    assert jnp.allclose(bce_fake, jnp.mean(-jnp.log(1.0 - y)), rtol=1e-5, atol=1e-5), bce_fake
    assert jnp.allclose(bce_real, jnp.mean(-jnp.log(y)), rtol=1e-5, atol=1e-5), bce_real

    # Ragged element count (numel % 1024 != 0): exercises the plain-JAX tail.
    y_ragged = jax.random.uniform(k1, (3, 5, 17, 9), dtype=jnp.float32,
                                  minval=0.01, maxval=0.99)
    r = jax.block_until_ready(loss_gan(y_ragged, real_label=True, ls=True, force_pallas=True))
    assert jnp.allclose(r, jnp.mean((y_ragged - 1.0) ** 2), rtol=1e-5, atol=1e-6), r

    # Larger input (default path, above the fast-path threshold): multi-tile
    # accumulation with a row-partial last tile.
    y_big = jax.random.uniform(k2, (2, 1, 768, 768), dtype=jnp.float32,
                               minval=0.01, maxval=0.99)
    b = jax.block_until_ready(loss_gan(y_big, real_label=False, ls=True))
    assert jnp.allclose(b, jnp.mean(y_big ** 2), rtol=1e-5, atol=1e-6), b

    print("KERNEL_OK")
</pallas_src>

<mosaic_0001>
module attributes {stable_mosaic.version = 11 : i64} {
  func.func @kernel(%arg0: i32, %arg1: i32, %arg2: memref<16x128xf32, #tpu.memory_space<vmem>>, %arg3: memref<1x1xf32, #tpu.memory_space<smem>>, %arg4: memref<8x128xf32, #tpu.memory_space<vmem>>) attributes {dimension_semantics = [#tpu.dimension_semantics<parallel>, #tpu.dimension_semantics<arbitrary>], iteration_bounds = array<i64: 1, 1>, scalar_prefetch = 0 : i64, scratch_operands = 1 : i64, tpu.core_type = #tpu.core_type<tc>, window_params = [{transform_indices = @transform_0, window_bounds = array<i64: 16, 128>}, {transform_indices = @transform_1, window_bounds = array<i64: 1, 1>}]} {
    %c0_i32 = arith.constant 0 : i32
    %0 = arith.cmpi eq, %arg1, %c0_i32 : i32
    %1 = arith.extui %0 : i1 to i32
    %c0_i32_0 = arith.constant 0 : i32
    %2 = arith.cmpi ne, %1, %c0_i32_0 : i32
    scf.if %2 {
      %cst_9 = arith.constant 0.000000e+00 : f32
      %15 = vector.broadcast %cst_9 : f32 to vector<8x128xf32>
      %c0_10 = arith.constant 0 : index
      %c0_11 = arith.constant 0 : index
      %16 = vector.load %arg4[%c0_10, %c0_11] : memref<8x128xf32, #tpu.memory_space<vmem>>, vector<8x128xf32>
      tpu.vector_store %arg4[%c0_10, %c0_11], %15 {strides = array<i32>} : memref<8x128xf32, #tpu.memory_space<vmem>>, vector<8x128xf32>,
    } else {
    }
    %c0 = arith.constant 0 : index
    %c0_1 = arith.constant 0 : index
    %3 = vector.load %arg4[%c0, %c0_1] : memref<8x128xf32, #tpu.memory_space<vmem>>, vector<8x128xf32>
    %c0_2 = arith.constant 0 : index
    %c0_3 = arith.constant 0 : index
    %4 = vector.load %arg2[%c0_2, %c0_3] : memref<16x128xf32, #tpu.memory_space<vmem>>, vector<16x128xf32>
    %cst = arith.constant 0.000000e+00 : f32
    %5 = vector.broadcast %cst : f32 to vector<16x128xf32>
    %6 = arith.subf %4, %5 : vector<16x128xf32>
    %7 = arith.mulf %6, %6 : vector<16x128xf32>
    %8 = vector.shape_cast %7 : vector<16x128xf32> to vector<2x8x128xf32>
    %cst_4 = arith.constant dense<0.000000e+00> : vector<8x128xf32>
    %9 = vector.multi_reduction <add>, %8, %cst_4 [0] : vector<2x8x128xf32> to vector<8x128xf32>
    %10 = arith.addf %3, %9 : vector<8x128xf32>
    %c0_5 = arith.constant 0 : index
    %c0_6 = arith.constant 0 : index
    %11 = vector.load %arg4[%c0_5, %c0_6] : memref<8x128xf32, #tpu.memory_space<vmem>>, vector<8x128xf32>
    tpu.vector_store %arg4[%c0_5, %c0_6], %10 {strides = array<i32>} : memref<8x128xf32, #tpu.memory_space<vmem>>, vector<8x128xf32>,
    %c0_i32_7 = arith.constant 0 : i32
    %12 = arith.cmpi eq, %arg1, %c0_i32_7 : i32
    %13 = arith.extui %12 : i1 to i32
    %c0_i32_8 = arith.constant 0 : i32
    %14 = arith.cmpi ne, %13, %c0_i32_8 : i32
    scf.if %14 {
      %c0_9 = arith.constant 0 : index
      %c0_10 = arith.constant 0 : index
      %15 = vector.load %arg4[%c0_9, %c0_10] : memref<8x128xf32, #tpu.memory_space<vmem>>, vector<8x128xf32>
      %16 = vector.shape_cast %15 : vector<8x128xf32> to vector<1x8x128xf32>
      %cst_11 = arith.constant dense<0.000000e+00> : vector<1xf32>
      %17 = vector.multi_reduction <add>, %16, %cst_11 [1, 2] : vector<1x8x128xf32> to vector<1xf32>
      %18 = vector.shape_cast %17 : vector<1xf32> to vector<1x1x1xf32>
      %19 = vector.extract %18[0, 0, 0] : f32 from vector<1x1x1xf32>
      %c0_12 = arith.constant 0 : index
      %c0_13 = arith.constant 0 : index
      %20 = memref.load %arg3[%c0_12, %c0_13] : memref<1x1xf32, #tpu.memory_space<smem>>
      memref.store %19, %arg3[%c0_12, %c0_13] : memref<1x1xf32, #tpu.memory_space<smem>>
    } else {
    }
    return
  }
  func.func @transform_0(%arg0: i32, %arg1: i32) -> (i32, i32) {
    %c1_i32 = arith.constant 1 : i32
    %0 = arith.muli %arg0, %c1_i32 : i32
    %1 = arith.addi %0, %arg1 : i32
    %c0_i32 = arith.constant 0 : i32
    %c0_i32_0 = arith.constant 0 : i32
    return %1, %c0_i32 : i32, i32
  }
  func.func @transform_1(%arg0: i32, %arg1: i32) -> (i32, i32) {
    %c0_i32 = arith.constant 0 : i32
    %c0_i32_0 = arith.constant 0 : i32
    return %arg0, %c0_i32 : i32, i32
  }
}

</mosaic_0001>

<llo_original>
// kernel: loss_gan.1
$region0: #{loss_gan.1}
  #allocation0 [shape = 'u32[]', space=smem, size = 0x4, offset = 0x4, fixed_abs, tag = 'smem constant byte address 0x4 - core index']
  #allocation1 [shape = 'u32[72,128]{1,0:T(1,128)}', space=vmem, size = 0x9000, scoped, tag = 'internal scratch']
  #allocation2 [shape = 'f32[8,128]{1,0:T(8,128)}', space=vmem, size = 0x1000, scoped, tag = 'scratch operand']
  %s0 = inlined_call_operand.vmem [shape: f32[16,128], index: 0, kind: input, shape index: {}]
  %s1 = inlined_call_operand.hbm [shape: f32[1,1], index: 1, kind: output, shape index: {}]
  %s2 = sld [smem:[#allocation0]]
  $region22: #{loss_gan.1} parent=0
    _
  %s4 = ssub.s32 1, %s2
  %s5 = scalar_select 0, %s4, %s2
  $region1: #{loss_gan.1} parent=0
    #allocation3 [shape = 'u8[512]{0}', space=smem, size = 0x200, scoped, tag = 'output window, operand 0, single buffered']
    #allocation4 [shape = 's32[1]{0}', space=sflag, size = 0x4, scoped, tag = 'scoped memory for loss_gan.1']
    %6 = vsyncpa [#allocation4], 0
    // Predicated region
    $region2: #{loss_gan.1} parent=1 // pred_check
      _
    $region3: #{loss_gan.1} parent=1 // pred_check_branch
      %8 = sbr.rel (0) target = $region5
    $region4: #{loss_gan.1} parent=1 // pred_region
      %s9 = sadd.s32 0, 0
      %s10 = smul.u32 2, %s9
      %p11 = scmp.lt.s32.totalorder %s10, 1
      %s12 = scalar_select %p11, %s10, 1
      %s13 = smul.addr %s12, 8
      %s14 = scalar_lea.vmem %s0, %s13
      %s15 = sadd.s32 0, 0
      %s16 = smul.u32 2, %s15
    $region5: #{loss_gan.1} parent=1 // pred_fallthru
      _
    %s17 = sadd.s32 0, 0
    %s18 = smul.u32 2, %s17
    %p19 = scmp.lt.s32.totalorder %s18, 1
    %s20 = scalar_select %p19, %s18, 1
    %s21 = smul.addr %s20, 8
    %s22 = scalar_lea.vmem %s0, %s21
    %s23 = sadd.s32 0, 0
    %s24 = smul.u32 2, %s23
    %p25 = scmp.lt.s32.totalorder %s24, 1
    %s26 = scalar_select %p25, %s24, 1
    %s27 = smul.addr %s26, 8
    %s28 = scalar_lea.vmem %s0, %s27
    %s29 = sadd.s32 0, 0
    %s30 = smul.u32 2, %s29
    %p31 = scmp.eq.s32.totalorder 0, 0
    // Predicated region
    $region6: #{loss_gan.1} parent=1 // pred_check
      %p32 = pneg %p31
    $region7: #{loss_gan.1} parent=1 // pred_check_branch
      %34 = sbr.rel (%p32) target = $region9
    $region8: #{loss_gan.1} parent=1 // pred_region
      %35 = vst [vmem:[#allocation2] sm:$0xff] 0.0
    $region9: #{loss_gan.1} parent=1 // pred_fallthru
      _
    %v36 = vld [vmem:[#allocation2] sm:$0xff]
    %v37 = vld [vmem:[%s28] sm:$0xff]
    %v38 = vld [vmem:[%s28 + $0x8] sm:$0xff]
    %v39 = vmul.f32 %v37, %v37
    %v40 = vmul.f32 %v38, %v38
    %v41 = vadd.f32 %v39, %v40
    %v42 = vadd.f32 %v36, %v41
    %43 = vst [vmem:[#allocation2] sm:$0xff] %v42
    // Predicated region
    $region10: #{loss_gan.1} parent=1 // pred_check
      %p44 = pneg %p31
    $region11: #{loss_gan.1} parent=1 // pred_check_branch
      %46 = sbr.rel (%p44) target = $region13
    $region12: #{loss_gan.1} parent=1 // pred_region
      %v47 = vld [vmem:[#allocation2] sm:$0xff]
      %48 = vadd.xlane.f32.xlu0 %v47
      %v49 = vpop.xlane.xlu0 %48
      %v50 = vrot.slane %v49, 4
      %v51 = vadd.f32 %v49, %v50
      %v52 = vrot.slane %v51, 2
      %v53 = vadd.f32 %v51, %v52
      %v54 = vrot.slane %v53, 1
      %v55 = vadd.f32 %v53, %v54
      %s56 = vtos %v55
      %s57 = scalar_lea.smem [#allocation3], 0
      %58 = sst [smem:[%s57]] %s56
    $region13: #{loss_gan.1} parent=1 // pred_fallthru
      _
    // Predicated region
    $region14: #{loss_gan.1} parent=1 // pred_check
      _
    $region15: #{loss_gan.1} parent=1 // pred_check_branch
      %60 = sbr.rel (0) target = $region17
    $region16: #{loss_gan.1} parent=1 // pred_region
      %62 = vsyncadd [#allocation4], 0
      %s64 = sshll.u32 %s1, 4
      %s65 = int_to_ptr.hbm [resolvable:$true] %s64
      %67 = dma.smem_to_hbm [#allocation3], 16, %s65, [#allocation4]
    $region17: #{loss_gan.1} parent=1 // pred_fallthru
      _
    // Predicated region
    $region18: #{loss_gan.1} parent=1 // pred_check
      _
    $region19: #{loss_gan.1} parent=1 // pred_check_branch
      %69 = sbr.rel (0) target = $region21
    $region20: #{loss_gan.1} parent=1 // pred_region
      %71 = dma.done [#allocation4], 16
    $region21: #{loss_gan.1} parent=1 // pred_fallthru
      _
    %72 = sfence
    %73 = vsyncpa [#allocation4], 1

</llo_original>
